<compile_context>
chip_gen: v5e
topology: v5e:2x2
jax: 0.10.0
libtpu: 0.0.40
codegen_flags: <defaults>
</compile_context>

<pallas_src>
import jax
import jax.numpy as jnp
from jax.experimental import pallas as pl
from jax.experimental.pallas import tpu as pltpu


def _round_up(n, m):
    return ((n + m - 1) // m) * m


def _num_tensorcores():
    """Best-effort TensorCore count of device 0 (2 on v7x, 1 on v5e/v6e)."""
    try:
        return max(1, int(getattr(jax.devices()[0], "num_cores", 1)))
    except Exception:
        return 1


def _policy_mlp_kernel(x_ref, w1_ref, w2_ref, w3_ref, b12_ref, b3_ref, o_ref):
    """x: [TB, S] bf16; w1: [S, H] bf16; w2: [H, H] bf16; w3: [H, P] bf16;
    b12: [2, H] f32; b3: [1, P] f32; o: [TB, P] f32   (P = action_dim padded to 8)."""
    # fc1 + relu.  (K=4 matmul; could be replaced by 4 VPU broadcast-mul-adds,
    # but that is second-order — only worth it if a bundle dump shows a relayout.)
    h = jnp.dot(x_ref[...], w1_ref[...], preferred_element_type=jnp.float32)
    h = jnp.maximum(h + b12_ref[0:1, :], 0.0)

    # fc2 + relu (cast activations back to the weight dtype so the MXU stays bf16).
    h = jnp.dot(h.astype(w2_ref.dtype), w2_ref[...],
                preferred_element_type=jnp.float32)
    h = jnp.maximum(h + b12_ref[1:2, :], 0.0)

    # fc3 — narrow (8-lane) output; padded logit columns are exactly zero.
    logits = jnp.dot(h.astype(w3_ref.dtype), w3_ref[...],
                     preferred_element_type=jnp.float32)
    o_ref[...] = (logits + b3_ref[...]).astype(o_ref.dtype)


def policy_network_forward(x, packed_params, *, action_dim=2, block_b=1024):
    """x: [B, state_dim] float32 -> logits [B, action_dim] float32."""
    w1, w2, w3p, b12, b3p = packed_params
    B, state_dim = x.shape
    out_pad = w3p.shape[1]  # action_dim padded to 8 lanes

    x = x.astype(w1.dtype)  # bf16 compute path (accumulation stays f32 in-kernel)

    # Choose the number of grid steps first, then the tile, so per-step row
    # padding is bounded by 8 rows instead of up to TB-8.
    n_steps = max(1, pl.cdiv(B, block_b))
    num_tc = _num_tensorcores()
    if num_tc > 1 and B >= 128 * num_tc:
        # v7x: give every TensorCore at least one "parallel" grid step.
        n_steps = max(n_steps, num_tc)
    tb = _round_up(pl.cdiv(B, n_steps), 8)
    b_pad = n_steps * tb
    if b_pad != B:
        x = jnp.pad(x, ((0, b_pad - B), (0, 0)))

    out_padded = pl.pallas_call(
        _policy_mlp_kernel,
        out_shape=jax.ShapeDtypeStruct((b_pad, out_pad), jnp.float32),
        grid=(n_steps,),
        in_specs=[
            # x: blocked over the batch axis.
            pl.BlockSpec((tb, state_dim), lambda i: (i, 0)),
            # Weights / biases: whole-array, VMEM-resident across all grid steps.
            pl.BlockSpec(memory_space=pltpu.MemorySpace.VMEM),
            pl.BlockSpec(memory_space=pltpu.MemorySpace.VMEM),
            pl.BlockSpec(memory_space=pltpu.MemorySpace.VMEM),
            pl.BlockSpec(memory_space=pltpu.MemorySpace.VMEM),
            pl.BlockSpec(memory_space=pltpu.MemorySpace.VMEM),
        ],
        # Narrow [TB, 8] f32 output slab (full-array last dim => legal block).
        out_specs=pl.BlockSpec((tb, out_pad), lambda i: (i, 0)),
        compiler_params=pltpu.CompilerParams(
            dimension_semantics=("parallel",),  # batch steps split across TCs on v7x
        ),
    )(x, w1, w2, w3p, b12, b3p)

    # Drop padded rows and padded logit lanes.
    return out_padded[:B, :action_dim]


def init_params(key, state_dim=4, hidden_dim=128, action_dim=2):
    """PyTorch nn.Linear-style init (U[-1/sqrt(fan_in), 1/sqrt(fan_in)]), stored [in, out]."""
    keys = jax.random.split(key, 6)

    def linear(kw, kb, fan_in, fan_out):
        bound = 1.0 / jnp.sqrt(jnp.float32(fan_in))
        w = jax.random.uniform(kw, (fan_in, fan_out), jnp.float32, -bound, bound)
        b = jax.random.uniform(kb, (1, fan_out), jnp.float32, -bound, bound)
        return w, b

    w1, b1 = linear(keys[0], keys[1], state_dim, hidden_dim)
    w2, b2 = linear(keys[2], keys[3], hidden_dim, hidden_dim)
    w3, b3 = linear(keys[4], keys[5], hidden_dim, action_dim)
    return (w1, b1, w2, b2, w3, b3)


def pack_params(params, *, compute_dtype=jnp.bfloat16, out_lane_pad=8):
    """One-time packing: bf16 weights, W3/b3 zero-padded to `out_lane_pad` columns,
    biases kept f32 (added to the f32 accumulator in-kernel)."""
    w1, b1, w2, b2, w3, b3 = params
    hidden = w1.shape[1]
    action_dim = w3.shape[1]
    pad_cols = max(out_lane_pad, action_dim)
    w3p = jnp.zeros((hidden, pad_cols), jnp.float32).at[:, :action_dim].set(w3)
    b3p = jnp.zeros((1, pad_cols), jnp.float32).at[:, :action_dim].set(b3)
    b12 = jnp.concatenate([b1, b2], axis=0)  # [2, hidden] f32
    return (w1.astype(compute_dtype),
            w2.astype(compute_dtype),
            w3p.astype(compute_dtype),
            b12.astype(jnp.float32),
            b3p.astype(jnp.float32))


def reference_forward(x, params):
    w1, b1, w2, b2, w3, b3 = params
    h = jnp.maximum(x @ w1 + b1, 0.0)
    h = jnp.maximum(h @ w2 + b2, 0.0)
    return h @ w3 + b3


if __name__ == "__main__":
    key = jax.random.PRNGKey(0)
    pkey, xkey1, xkey2 = jax.random.split(key, 3)

    state_dim, hidden_dim, action_dim = 4, 128, 2

    params = init_params(pkey, state_dim, hidden_dim, action_dim)
    packed = pack_params(params)

    # Small batch: single grid step.
    x_small = jax.random.normal(xkey1, (8, state_dim), jnp.float32)
    logits_small = policy_network_forward(x_small, packed, action_dim=action_dim)
    jax.block_until_ready(logits_small)
    ref_small = reference_forward(x_small, params)
    assert logits_small.shape == (8, action_dim)
    # bf16 weights/activations with f32 accumulation -> ~1e-2 relative error.
    assert jnp.allclose(logits_small, ref_small, atol=3e-2, rtol=3e-2)

    # Larger ragged batch: exercises row padding (<8 garbage rows) and, on v7x,
    # the multi-step "parallel" batch grid.
    x_big = jax.random.normal(xkey2, (300, state_dim), jnp.float32)
    logits_big = policy_network_forward(x_big, packed, action_dim=action_dim)
    jax.block_until_ready(logits_big)
    ref_big = reference_forward(x_big, params)
    assert logits_big.shape == (300, action_dim)
    assert jnp.allclose(logits_big, ref_big, atol=3e-2, rtol=3e-2)

    # TODO(synk): get_action's Categorical sampling / log_prob are host-side
    # glue in the original module and are intentionally left outside the kernel
    # (the kernel returns logits, matching forward()).
    print("KERNEL_OK")
</pallas_src>

<mosaic_0001>
module attributes {stable_mosaic.version = 11 : i64} {
  func.func @_policy_mlp_kernel(%arg0: i32, %arg1: memref<8x4xbf16, #tpu.memory_space<vmem>>, %arg2: memref<4x128xbf16, #tpu.memory_space<vmem>>, %arg3: memref<128x128xbf16, #tpu.memory_space<vmem>>, %arg4: memref<128x8xbf16, #tpu.memory_space<vmem>>, %arg5: memref<2x128xf32, #tpu.memory_space<vmem>>, %arg6: memref<1x8xf32, #tpu.memory_space<vmem>>, %arg7: memref<8x8xf32, #tpu.memory_space<vmem>>) attributes {dimension_semantics = [#tpu.dimension_semantics<parallel>], iteration_bounds = array<i64: 1>, scalar_prefetch = 0 : i64, scratch_operands = 0 : i64, tpu.core_type = #tpu.core_type<tc>, window_params = [{transform_indices = @transform_0, window_bounds = array<i64: 8, 4>}, {pipeline_mode = #tpu.pipeline_mode<synchronous>, transform_indices = @transform_1, window_bounds = array<i64: 4, 128>}, {pipeline_mode = #tpu.pipeline_mode<synchronous>, transform_indices = @transform_2, window_bounds = array<i64: 128, 128>}, {pipeline_mode = #tpu.pipeline_mode<synchronous>, transform_indices = @transform_3, window_bounds = array<i64: 128, 8>}, {pipeline_mode = #tpu.pipeline_mode<synchronous>, transform_indices = @transform_4, window_bounds = array<i64: 2, 128>}, {pipeline_mode = #tpu.pipeline_mode<synchronous>, transform_indices = @transform_5, window_bounds = array<i64: 1, 8>}, {transform_indices = @transform_6, window_bounds = array<i64: 8, 8>}]} {
    %c0 = arith.constant 0 : index
    %c0_0 = arith.constant 0 : index
    %0 = vector.load %arg1[%c0, %c0_0] : memref<8x4xbf16, #tpu.memory_space<vmem>>, vector<8x4xbf16>
    %c0_1 = arith.constant 0 : index
    %c0_2 = arith.constant 0 : index
    %1 = vector.load %arg2[%c0_1, %c0_2] : memref<4x128xbf16, #tpu.memory_space<vmem>>, vector<4x128xbf16>
    %cst = arith.constant dense<0.000000e+00> : vector<8x128xf32>
    %2 = tpu.matmul %0, %1, %cst {dimension_numbers = #tpu.dot_dimension_numbers<[1], [0], [0], [1], [0, 0, 1, 1], [], []>} : vector<8x4xbf16>, vector<4x128xbf16>, vector<8x128xf32> -> vector<8x128xf32>
    %c0_3 = arith.constant 0 : index
    %c0_4 = arith.constant 0 : index
    %3 = vector.load %arg5[%c0_3, %c0_4] : memref<2x128xf32, #tpu.memory_space<vmem>>, vector<1x128xf32>
    %4 = vector.broadcast %3 : vector<1x128xf32> to vector<8x128xf32>
    %5 = arith.addf %2, %4 : vector<8x128xf32>
    %cst_5 = arith.constant 0.000000e+00 : f32
    %6 = vector.broadcast %cst_5 : f32 to vector<8x128xf32>
    %7 = arith.maximumf %5, %6 : vector<8x128xf32>
    %8 = arith.truncf %7 : vector<8x128xf32> to vector<8x128xbf16>
    %c0_6 = arith.constant 0 : index
    %c0_7 = arith.constant 0 : index
    %9 = vector.load %arg3[%c0_6, %c0_7] : memref<128x128xbf16, #tpu.memory_space<vmem>>, vector<128x128xbf16>
    %cst_8 = arith.constant dense<0.000000e+00> : vector<8x128xf32>
    %10 = tpu.matmul %8, %9, %cst_8 {dimension_numbers = #tpu.dot_dimension_numbers<[1], [0], [0], [1], [0, 0, 1, 1], [], []>} : vector<8x128xbf16>, vector<128x128xbf16>, vector<8x128xf32> -> vector<8x128xf32>
    %c1 = arith.constant 1 : index
    %c0_9 = arith.constant 0 : index
    %11 = vector.load %arg5[%c1, %c0_9] : memref<2x128xf32, #tpu.memory_space<vmem>>, vector<1x128xf32>
    %12 = vector.broadcast %11 : vector<1x128xf32> to vector<8x128xf32>
    %13 = arith.addf %10, %12 : vector<8x128xf32>
    %cst_10 = arith.constant 0.000000e+00 : f32
    %14 = vector.broadcast %cst_10 : f32 to vector<8x128xf32>
    %15 = arith.maximumf %13, %14 : vector<8x128xf32>
    %16 = arith.truncf %15 : vector<8x128xf32> to vector<8x128xbf16>
    %c0_11 = arith.constant 0 : index
    %c0_12 = arith.constant 0 : index
    %17 = vector.load %arg4[%c0_11, %c0_12] : memref<128x8xbf16, #tpu.memory_space<vmem>>, vector<128x8xbf16>
    %cst_13 = arith.constant dense<0.000000e+00> : vector<8x8xf32>
    %18 = tpu.matmul %16, %17, %cst_13 {dimension_numbers = #tpu.dot_dimension_numbers<[1], [0], [0], [1], [0, 0, 1, 1], [], []>} : vector<8x128xbf16>, vector<128x8xbf16>, vector<8x8xf32> -> vector<8x8xf32>
    %c0_14 = arith.constant 0 : index
    %c0_15 = arith.constant 0 : index
    %19 = vector.load %arg6[%c0_14, %c0_15] : memref<1x8xf32, #tpu.memory_space<vmem>>, vector<1x8xf32>
    %20 = vector.broadcast %19 : vector<1x8xf32> to vector<8x8xf32>
    %21 = arith.addf %18, %20 : vector<8x8xf32>
    %c0_16 = arith.constant 0 : index
    %c0_17 = arith.constant 0 : index
    %22 = vector.load %arg7[%c0_16, %c0_17] : memref<8x8xf32, #tpu.memory_space<vmem>>, vector<8x8xf32>
    tpu.vector_store %arg7[%c0_16, %c0_17], %21 {strides = array<i32>} : memref<8x8xf32, #tpu.memory_space<vmem>>, vector<8x8xf32>,
    return
  }
  func.func @transform_0(%arg0: i32) -> (i32, i32) {
    %c0_i32 = arith.constant 0 : i32
    %c0_i32_0 = arith.constant 0 : i32
    return %arg0, %c0_i32 : i32, i32
  }
  func.func @transform_1(%arg0: i32) -> (i32, i32) {
    %c0_i32 = arith.constant 0 : i32
    %c0_i32_0 = arith.constant 0 : i32
    %c0_i32_1 = arith.constant 0 : i32
    return %c0_i32, %c0_i32_0 : i32, i32
  }
  func.func @transform_2(%arg0: i32) -> (i32, i32) {
    %c0_i32 = arith.constant 0 : i32
    %c0_i32_0 = arith.constant 0 : i32
    %c0_i32_1 = arith.constant 0 : i32
    return %c0_i32, %c0_i32_0 : i32, i32
  }
  func.func @transform_3(%arg0: i32) -> (i32, i32) {
    %c0_i32 = arith.constant 0 : i32
    %c0_i32_0 = arith.constant 0 : i32
    %c0_i32_1 = arith.constant 0 : i32
    return %c0_i32, %c0_i32_0 : i32, i32
  }
  func.func @transform_4(%arg0: i32) -> (i32, i32) {
    %c0_i32 = arith.constant 0 : i32
    %c0_i32_0 = arith.constant 0 : i32
    %c0_i32_1 = arith.constant 0 : i32
    return %c0_i32, %c0_i32_0 : i32, i32
  }
  func.func @transform_5(%arg0: i32) -> (i32, i32) {
    %c0_i32 = arith.constant 0 : i32
    %c0_i32_0 = arith.constant 0 : i32
    %c0_i32_1 = arith.constant 0 : i32
    return %c0_i32, %c0_i32_0 : i32, i32
  }
  func.func @transform_6(%arg0: i32) -> (i32, i32) {
    %c0_i32 = arith.constant 0 : i32
    %c0_i32_0 = arith.constant 0 : i32
    return %arg0, %c0_i32 : i32, i32
  }
}

</mosaic_0001>

<llo_original>
// kernel: tpu_custom_call.1
$region0: #{tpu_custom_call.1}
  #allocation0 [shape = 'u32[]', space=smem, size = 0x4, offset = 0x4, fixed_abs, tag = 'smem constant byte address 0x4 - core index']
  #allocation1 [shape = 'u32[72,128]{1,0:T(1,128)}', space=vmem, size = 0x9000, scoped, tag = 'internal scratch']
  %s0 = inlined_call_operand.vmem [shape: bf16[8,4], index: 0, kind: input, shape index: {}]
  %s1 = inlined_call_operand.vmem [shape: bf16[4,128], index: 1, kind: input, shape index: {}]
  %s2 = inlined_call_operand.vmem [shape: bf16[128,128], index: 2, kind: input, shape index: {}]
  %s3 = inlined_call_operand.vmem [shape: bf16[128,8], index: 3, kind: input, shape index: {}]
  %s4 = inlined_call_operand.vmem [shape: f32[2,128], index: 4, kind: input, shape index: {}]
  %s5 = inlined_call_operand.vmem [shape: f32[1,8], index: 5, kind: input, shape index: {}]
  %s6 = inlined_call_operand.hbm [shape: f32[8,8], index: 6, kind: output, shape index: {}]
  %s7 = sld [smem:[#allocation0]]
  $region34: #{tpu_custom_call.1} parent=0
    _
  %s9 = ssub.s32 1, %s7
  %s10 = scalar_select 0, %s9, %s7
  $region1: #{tpu_custom_call.1} parent=0
    #allocation2 [shape = 'u8[4096]{0}', space=vmem, size = 0x1000, scoped, tag = 'output window, operand 0, single buffered']
    #allocation3 [shape = 's32[1]{0}', space=sflag, size = 0x4, scoped, tag = 'scoped memory for tpu_custom_call.1']
    %11 = vsyncpa [#allocation3], 0
    // Predicated region
    $region2: #{tpu_custom_call.1} parent=1 // pred_check
      _
    $region3: #{tpu_custom_call.1} parent=1 // pred_check_branch
      %13 = sbr.rel (0) target = $region5
    $region4: #{tpu_custom_call.1} parent=1 // pred_region
      _
    $region5: #{tpu_custom_call.1} parent=1 // pred_fallthru
      _
    // Predicated region
    $region6: #{tpu_custom_call.1} parent=1 // pred_check
      _
    $region7: #{tpu_custom_call.1} parent=1 // pred_check_branch
      %15 = sbr.rel (0) target = $region9
    $region8: #{tpu_custom_call.1} parent=1 // pred_region
      _
    $region9: #{tpu_custom_call.1} parent=1 // pred_fallthru
      _
    // Predicated region
    $region10: #{tpu_custom_call.1} parent=1 // pred_check
      _
    $region11: #{tpu_custom_call.1} parent=1 // pred_check_branch
      %17 = sbr.rel (0) target = $region13
    $region12: #{tpu_custom_call.1} parent=1 // pred_region
      _
    $region13: #{tpu_custom_call.1} parent=1 // pred_fallthru
      _
    // Predicated region
    $region14: #{tpu_custom_call.1} parent=1 // pred_check
      _
    $region15: #{tpu_custom_call.1} parent=1 // pred_check_branch
      %19 = sbr.rel (0) target = $region17
    $region16: #{tpu_custom_call.1} parent=1 // pred_region
      _
    $region17: #{tpu_custom_call.1} parent=1 // pred_fallthru
      _
    // Predicated region
    $region18: #{tpu_custom_call.1} parent=1 // pred_check
      _
    $region19: #{tpu_custom_call.1} parent=1 // pred_check_branch
      %21 = sbr.rel (0) target = $region21
    $region20: #{tpu_custom_call.1} parent=1 // pred_region
      _
    $region21: #{tpu_custom_call.1} parent=1 // pred_fallthru
      _
    // Predicated region
    $region22: #{tpu_custom_call.1} parent=1 // pred_check
      _
    $region23: #{tpu_custom_call.1} parent=1 // pred_check_branch
      %23 = sbr.rel (0) target = $region25
    $region24: #{tpu_custom_call.1} parent=1 // pred_region
      _
    $region25: #{tpu_custom_call.1} parent=1 // pred_fallthru
      _
    %v25 = vld [vmem:[%s0] sm:$0xf]
    %v26 = vld [vmem:[%s1] sm:$0x3]
    %v27 = vld [vmem:[%s4] sm:$0x1]
    %v28 = vperm.slane %v27, 0
    %vm29 = vcmask 31744
    %v31 = vsel %vm29, %v25, 0
    %vm33 = vcmask 1041408
    %v35 = vsel %vm33, %v26, 0
    %37 = vmatpush.bf16.msra.mxu0 0
    %38 = vmatpush.bf16.msra.mxu0 0
    %39 = vmatpush.bf16.msra.mxu0 0
    %40 = vmatpush.bf16.msra.mxu0 0
    %41 = vmatpush.bf16.msra.mxu0 0
    %42 = vmatpush.bf16.msra.mxu0 0
    %43 = vmatpush.bf16.msra.mxu0 0
    %44 = vmatpush.bf16.msra.mxu0 %v35
    %45 = vmatmul.bf16.gmra.mxu0 %v31
    %v46 = vpop.f32.mrf.mxu0
    %v47 = vadd.f32 %v28, %v46
    %v48 = vpop.f32.mrf.mxu0
    %49 = vdwg.mxu0
    %v50 = vmax.f32 %v47, 0.0
    %v51 = vpack.c.bf16 %v50, %v50
    %v52 = vld [vmem:[%s2] sm:$0xf]
    %v53 = vld [vmem:[%s2 + $0x4] sm:$0xf]
    %v54 = vld [vmem:[%s2 + $0x8] sm:$0xf]
    %v55 = vld [vmem:[%s2 + $0xc] sm:$0xf]
    %v56 = vld [vmem:[%s2 + $0x10] sm:$0xf]
    %v57 = vld [vmem:[%s2 + $0x14] sm:$0xf]
    %v58 = vld [vmem:[%s2 + $0x18] sm:$0xf]
    %v59 = vld [vmem:[%s2 + $0x1c] sm:$0xf]
    %v60 = vld [vmem:[%s2 + $0x20] sm:$0xf]
    %v61 = vld [vmem:[%s2 + $0x24] sm:$0xf]
    %v62 = vld [vmem:[%s2 + $0x28] sm:$0xf]
    %v63 = vld [vmem:[%s2 + $0x2c] sm:$0xf]
    %v64 = vld [vmem:[%s2 + $0x30] sm:$0xf]
    %v65 = vld [vmem:[%s2 + $0x34] sm:$0xf]
    %v66 = vld [vmem:[%s2 + $0x38] sm:$0xf]
    %v67 = vld [vmem:[%s2 + $0x3c] sm:$0xf]
    %v68 = vld [vmem:[%s4 + $0x1] sm:$0x1]
    %v69 = vperm.slane %v68, 0
    %v86 = vunpack.c.l.b16 %v52
    %v87 = vunpack.c.l.b16 %v53
    %v88 = vunpack.c.l.b16 %v54
    %v89 = vunpack.c.l.b16 %v55
    %v90 = vunpack.c.l.b16 %v56
    %v91 = vunpack.c.l.b16 %v57
    %v92 = vunpack.c.l.b16 %v58
    %v93 = vunpack.c.l.b16 %v59
    %v94 = vunpack.c.l.b16 %v60
    %v95 = vunpack.c.l.b16 %v61
    %v96 = vunpack.c.l.b16 %v62
    %v97 = vunpack.c.l.b16 %v63
    %v98 = vunpack.c.l.b16 %v64
    %v99 = vunpack.c.l.b16 %v65
    %v100 = vunpack.c.l.b16 %v66
    %v101 = vunpack.c.l.b16 %v67
    %v102 = vpack.c.b16 %v87, %v86
    %v103 = vpack.c.b16 %v89, %v88
    %v104 = vpack.c.b16 %v91, %v90
    %v105 = vpack.c.b16 %v93, %v92
    %v106 = vpack.c.b16 %v95, %v94
    %v107 = vpack.c.b16 %v97, %v96
    %v108 = vpack.c.b16 %v99, %v98
    %v109 = vpack.c.b16 %v101, %v100
    %118 = vmatpush.bf16.msra.mxu0 %v109
    %119 = vmatpush.bf16.msra.mxu0 %v108
    %120 = vmatpush.bf16.msra.mxu0 %v107
    %121 = vmatpush.bf16.msra.mxu0 %v106
    %122 = vmatpush.bf16.msra.mxu0 %v105
    %123 = vmatpush.bf16.msra.mxu0 %v104
    %124 = vmatpush.bf16.msra.mxu0 %v103
    %125 = vmatpush.bf16.msra.mxu0 %v102
    %126 = vmatmul.bf16.gmra.mxu0 %v51
    %v127 = vpop.f32.mrf.mxu0
    %v128 = vadd.f32 %v69, %v127
    %v129 = vpop.f32.mrf.mxu0
    %130 = vdwg.mxu0
    %v131 = vmax.f32 %v128, 0.0
    %v132 = vpack.c.bf16 %v131, %v131
    %v133 = vld [vmem:[%s3] sm:$0xf]
    %v134 = vld [vmem:[%s3 + $0x4] sm:$0xf]
    %v135 = vld [vmem:[%s3 + $0x8] sm:$0xf]
    %v136 = vld [vmem:[%s3 + $0xc] sm:$0xf]
    %v137 = vld [vmem:[%s3 + $0x10] sm:$0xf]
    %v138 = vld [vmem:[%s3 + $0x14] sm:$0xf]
    %v139 = vld [vmem:[%s3 + $0x18] sm:$0xf]
    %v140 = vld [vmem:[%s3 + $0x1c] sm:$0xf]
    %v141 = vld [vmem:[%s3 + $0x20] sm:$0xf]
    %v142 = vld [vmem:[%s3 + $0x24] sm:$0xf]
    %v143 = vld [vmem:[%s3 + $0x28] sm:$0xf]
    %v144 = vld [vmem:[%s3 + $0x2c] sm:$0xf]
    %v145 = vld [vmem:[%s3 + $0x30] sm:$0xf]
    %v146 = vld [vmem:[%s3 + $0x34] sm:$0xf]
    %v147 = vld [vmem:[%s3 + $0x38] sm:$0xf]
    %v148 = vld [vmem:[%s3 + $0x3c] sm:$0xf]
    %v149 = vld [vmem:[%s5] sm:$0x1]
    %v151 = vperm.slane %v149, 0
    %v169 = vunpack.c.l.b16 %v133
    %v170 = vunpack.c.l.b16 %v134
    %v171 = vunpack.c.l.b16 %v135
    %v172 = vunpack.c.l.b16 %v136
    %v173 = vunpack.c.l.b16 %v137
    %v174 = vunpack.c.l.b16 %v138
    %v175 = vunpack.c.l.b16 %v139
    %v176 = vunpack.c.l.b16 %v140
    %v177 = vunpack.c.l.b16 %v141
    %v178 = vunpack.c.l.b16 %v142
    %v179 = vunpack.c.l.b16 %v143
    %v180 = vunpack.c.l.b16 %v144
    %v181 = vunpack.c.l.b16 %v145
    %v182 = vunpack.c.l.b16 %v146
    %v183 = vunpack.c.l.b16 %v147
    %v184 = vunpack.c.l.b16 %v148
    %v185 = vpack.c.b16 %v170, %v169
    %v186 = vpack.c.b16 %v172, %v171
    %v187 = vpack.c.b16 %v174, %v173
    %v188 = vpack.c.b16 %v176, %v175
    %v189 = vpack.c.b16 %v178, %v177
    %v190 = vpack.c.b16 %v180, %v179
    %v191 = vpack.c.b16 %v182, %v181
    %v192 = vpack.c.b16 %v184, %v183
    %201 = vmatpush.bf16.msra.mxu0 %v192
    %202 = vmatpush.bf16.msra.mxu0 %v191
    %203 = vmatpush.bf16.msra.mxu0 %v190
    %204 = vmatpush.bf16.msra.mxu0 %v189
    %205 = vmatpush.bf16.msra.mxu0 %v188
    %206 = vmatpush.bf16.msra.mxu0 %v187
    %207 = vmatpush.bf16.msra.mxu0 %v186
    %208 = vmatpush.bf16.msra.mxu0 %v185
    %209 = vmatmul.bf16.gmra.mxu0 %v132
    %v210 = vpop.f32.mrf.mxu0
    %v211 = vadd.f32 %v151, %v210
    %v212 = vpop.f32.mrf.mxu0
    %213 = vdwg.mxu0
    %vm214 = vcmask 64512
    %215 = vst.msk [vmem:[#allocation2] sm:$0xff] %vm214, %v211
    // Predicated region
    $region26: #{tpu_custom_call.1} parent=1 // pred_check
      _
    $region27: #{tpu_custom_call.1} parent=1 // pred_check_branch
      %217 = sbr.rel (0) target = $region29
    $region28: #{tpu_custom_call.1} parent=1 // pred_region
      %219 = vsyncadd [#allocation3], 0
      %s221 = sshll.u32 [#allocation2], 4
      %s222 = int_to_ptr.vmem [resolvable:$true] %s221
      %s223 = sshll.u32 %s6, 4
      %s224 = int_to_ptr.hbm [resolvable:$true] %s223
      %226 = dma.vmem_to_hbm [thread:$0]  %s222, 128, %s224, [#allocation3]
    $region29: #{tpu_custom_call.1} parent=1 // pred_fallthru
      _
    // Predicated region
    $region30: #{tpu_custom_call.1} parent=1 // pred_check
      _
    $region31: #{tpu_custom_call.1} parent=1 // pred_check_branch
      %228 = sbr.rel (0) target = $region33
    $region32: #{tpu_custom_call.1} parent=1 // pred_region
      %230 = dma.done [#allocation3], 128
    $region33: #{tpu_custom_call.1} parent=1 // pred_fallthru
      _
    %231 = vsyncpa [#allocation3], 1

</llo_original>
